<compile_context>
chip_gen: v6e
topology: v6e:2x2x1
jax: 0.10.0
libtpu: 0.0.40
codegen_flags: <defaults>
</compile_context>

<pallas_src>
import math

import jax
import jax.numpy as jnp
from jax import lax
from jax.experimental import pallas as pl
from jax.experimental.pallas import tpu as pltpu

ROUTE_VOCAB = 2602
STATION_VOCAB = 37689
DIRECTION_VOCAB = 2
HOUR_VOCAB = 24
SMALL_ROWS = 32  # direction (2) + hour (24), zero-padded to a sublane multiple


def _data_embedding_kernel(
    # scalar-prefetch (SMEM, 1-D int32 of length B*L)
    r_idx, s_idx,
    # blocked activations (VMEM)
    xcat_ref,       # (1, TL, 3*c_in+2) f32   [x_prev | x | x_next | time-feats]
    ids_ref,        # (1, TL, 2) int32        [direction, hour]
    pe_ref,         # (TL, d_model) f32       positional enc. with biases folded in
    # constant parameters (VMEM, single-buffered)
    w_ref,          # (3*c_in+2, d_model) f32 fused conv + linear weight
    small_tbl_ref,  # (SMALL_ROWS, d_model) f32 [direction ; hour ; zero pad]
    route_ref,      # (ROUTE_VOCAB, d_model) f32, resident
    station_ref,    # (STATION_VOCAB, d_model) f32, resident
    # output block
    o_ref,          # (1, TL, d_model)
    # scratch
    gather_acc,     # (TL, d_model) f32
):
    b = pl.program_id(0)
    lblk = pl.program_id(1)
    t_tile = o_ref.shape[1]
    base = (b * pl.num_programs(1) + lblk) * t_tile  # first flat token of this block

    # --- TokenEmbedding (3-tap circular conv) + TimeFeatureEmbedding fused into
    #     a single K=(3*c_in+2) MXU matmul; biases are folded into pe_ref. -------
    dense = jnp.dot(xcat_ref[0], w_ref[...], preferred_element_type=jnp.float32)

    # --- direction + hour embeddings as a one-hot MXU matmul (disjoint index
    #     ranges: direction in [0,2), hour offset to [2,26)). -------------------
    ids = ids_ref[0]                                   # (TL, 2) int32
    direc = ids[:, 0:1]                                # (TL, 1)
    hour = ids[:, 1:2] + DIRECTION_VOCAB               # (TL, 1)
    rows = lax.broadcasted_iota(jnp.int32, (t_tile, SMALL_ROWS), 1)
    onehot = ((rows == direc) | (rows == hour)).astype(jnp.float32)
    small_emb = jnp.dot(onehot, small_tbl_ref[...],
                        preferred_element_type=jnp.float32)

    # --- route + station embeddings: per-token dynamic-row VMEM gather from the
    #     resident tables (zero HBM traffic per token). -------------------------
    def gather_token(t, carry):
        gather_acc[pl.ds(t, 1), :] = (
            route_ref[pl.ds(r_idx[base + t], 1), :]
            + station_ref[pl.ds(s_idx[base + t], 1), :]
        )
        return carry

    lax.fori_loop(0, t_tile, gather_token, 0, unroll=8)

    # --- Sum all embedding streams.
    # TODO(synk): dropout(p=0.1) treated as identity (inference mode); no
    # stochastic masking in-kernel.
    o_ref[0] = dense + pe_ref[...] + small_emb + gather_acc[...]


def data_embedding(x, x_mark, pe, conv_w, conv_b, lin_w, lin_b,
                   route_tbl, station_tbl, direc_tbl, hour_tbl,
                   *, token_tile=512):
    """x: [B, L, c_in] float; x_mark: [B, L, 6] (4 int id cols + 2 time features)."""
    B, L, c_in = x.shape
    d_model = route_tbl.shape[1]
    TL = min(token_tile, L)
    assert L % TL == 0, "seq length must be a multiple of the token tile"
    assert TL % 8 == 0, "token tile must be a sublane multiple"
    nL = L // TL
    KC = 3 * c_in + 2

    x = x.astype(jnp.float32)
    # Circular conv halo handled once wrapper-side (pure layout): every
    # (batch, seq-tile) block is then self-contained — no cross-block halo DMA.
    x_prev = jnp.concatenate([x[:, L - 1:], x[:, :L - 1]], axis=1)   # x[(l-1) % L]
    x_next = jnp.concatenate([x[:, 1:], x[:, :1]], axis=1)           # x[(l+1) % L]
    tfeat = x_mark[..., 4:6].astype(jnp.float32)
    xcat = jnp.concatenate([x_prev, x, x_next, tfeat], axis=-1)      # (B, L, KC)

    # Fused weight (KC, d_model): conv taps stacked over the channel axis,
    # followed by the Linear(2 -> d_model) weight; biases folded into pe.
    w_fused = jnp.concatenate([conv_w[0], conv_w[1], conv_w[2], lin_w], axis=0)
    pe_plus = pe + conv_b + lin_b                                    # (L, d_model)

    # Integer id columns. route/station stay as 1-D SMEM scalar-prefetch arrays
    # (clamped: dynamic VMEM reads have no OOB check); direction/hour go to VMEM
    # for the one-hot matmul.
    xi = x_mark[..., :4].astype(jnp.int32)
    r_idx = jnp.clip(xi[..., 0], 0, route_tbl.shape[0] - 1).reshape(B * L)
    s_idx = jnp.clip(xi[..., 1], 0, station_tbl.shape[0] - 1).reshape(B * L)
    small_ids = jnp.stack([xi[..., 2], xi[..., 3]], axis=-1)         # (B, L, 2) i32

    # Combined small table: rows [0,2) = direction, [2,26) = hour, rest zero.
    small_tbl = jnp.zeros((SMALL_ROWS, d_model), jnp.float32)
    small_tbl = small_tbl.at[:DIRECTION_VOCAB].set(direc_tbl)
    small_tbl = small_tbl.at[DIRECTION_VOCAB:DIRECTION_VOCAB + HOUR_VOCAB].set(hour_tbl)

    const = pl.Buffered(1)  # constant index_map -> never re-fetched, single buffer

    grid_spec = pltpu.PrefetchScalarGridSpec(
        num_scalar_prefetch=2,
        grid=(B, nL),
        in_specs=[
            pl.BlockSpec((1, TL, KC), lambda b, l, r, s: (b, l, 0)),        # xcat
            pl.BlockSpec((1, TL, 2), lambda b, l, r, s: (b, l, 0)),         # dir/hour
            pl.BlockSpec((TL, d_model), lambda b, l, r, s: (l, 0)),         # pe+bias
            pl.BlockSpec((KC, d_model), lambda b, l, r, s: (0, 0),
                         pipeline_mode=const),                              # fused W
            pl.BlockSpec((SMALL_ROWS, d_model), lambda b, l, r, s: (0, 0),
                         pipeline_mode=const),                              # small tbl
            pl.BlockSpec(route_tbl.shape, lambda b, l, r, s: (0, 0),
                         pipeline_mode=const),                              # route tbl
            pl.BlockSpec(station_tbl.shape, lambda b, l, r, s: (0, 0),
                         pipeline_mode=const),                              # station tbl
        ],
        out_specs=pl.BlockSpec((1, TL, d_model), lambda b, l, r, s: (b, l, 0)),
        scratch_shapes=[pltpu.VMEM((TL, d_model), jnp.float32)],
    )

    return pl.pallas_call(
        _data_embedding_kernel,
        out_shape=jax.ShapeDtypeStruct((B, L, d_model), jnp.float32),
        grid_spec=grid_spec,
        compiler_params=pltpu.CompilerParams(
            dimension_semantics=("parallel", "parallel"),
            # ~19.7 MiB single-buffered tables + ~1.5 MiB tiles/scratch + headroom.
            vmem_limit_bytes=32 * 1024 * 1024,
        ),
    )(r_idx, s_idx,
      xcat, small_ids, pe_plus,
      w_fused, small_tbl, route_tbl, station_tbl)


def positional_encoding(L, d_model):
    """Same formula as the PyTorch PositionalEmbedding buffer (first L rows)."""
    position = jnp.arange(L, dtype=jnp.float32)[:, None]
    div_term = jnp.exp(jnp.arange(0, d_model, 2, dtype=jnp.float32)
                       * (-math.log(10000.0) / d_model))
    ang = position * div_term
    pe = jnp.zeros((L, d_model), dtype=jnp.float32)
    pe = pe.at[:, 0::2].set(jnp.sin(ang))
    pe = pe.at[:, 1::2].set(jnp.cos(ang))
    return pe


def _reference(x, x_mark, pe, conv_w, conv_b, lin_w, lin_b,
               route_tbl, station_tbl, direc_tbl, hour_tbl):
    B, L, _ = x.shape
    x = x.astype(jnp.float32)
    x_prev = jnp.concatenate([x[:, L - 1:], x[:, :L - 1]], axis=1)
    x_next = jnp.concatenate([x[:, 1:], x[:, :1]], axis=1)
    value = (jnp.einsum('blc,cd->bld', x_prev, conv_w[0])
             + jnp.einsum('blc,cd->bld', x, conv_w[1])
             + jnp.einsum('blc,cd->bld', x_next, conv_w[2])
             + conv_b)
    xi = x_mark[..., :4].astype(jnp.int32)
    temporal = (jnp.take(route_tbl, xi[..., 0], axis=0)
                + jnp.take(station_tbl, xi[..., 1], axis=0)
                + jnp.take(direc_tbl, xi[..., 2], axis=0)
                + jnp.take(hour_tbl, xi[..., 3], axis=0))
    time_embed = jnp.einsum('blc,cd->bld',
                            x_mark[..., 4:6].astype(jnp.float32), lin_w) + lin_b
    return value + pe[None] + temporal + time_embed


if __name__ == "__main__":
    B, L, c_in, d_model = 2, 8, 4, 128

    key = jax.random.PRNGKey(0)
    (k_rt, k_st, k_dt, k_ht, k_cw, k_cb,
     k_lw, k_lb, k_x, k_ids, k_tf) = jax.random.split(key, 11)

    # nn.Embedding-style tables (float32, N(0,1)).
    route_tbl = jax.random.normal(k_rt, (ROUTE_VOCAB, d_model), jnp.float32)
    station_tbl = jax.random.normal(k_st, (STATION_VOCAB, d_model), jnp.float32)
    direc_tbl = jax.random.normal(k_dt, (DIRECTION_VOCAB, d_model), jnp.float32)
    hour_tbl = jax.random.normal(k_ht, (HOUR_VOCAB, d_model), jnp.float32)

    # TokenEmbedding conv params stored as (3, c_in, d_model): W[k] = torch_w[:, :, k].T
    conv_w = jax.random.normal(k_cw, (3, c_in, d_model), jnp.float32) * (2.0 / (3 * c_in)) ** 0.5
    conv_b = jax.random.normal(k_cb, (1, d_model), jnp.float32) * 0.02
    lin_w = jax.random.normal(k_lw, (2, d_model), jnp.float32) * 0.5
    lin_b = jax.random.normal(k_lb, (1, d_model), jnp.float32) * 0.02

    x = jax.random.normal(k_x, (B, L, c_in), jnp.float32)

    ids = jnp.stack([
        jax.random.randint(jax.random.fold_in(k_ids, 0), (B, L), 0, ROUTE_VOCAB),
        jax.random.randint(jax.random.fold_in(k_ids, 1), (B, L), 0, STATION_VOCAB),
        jax.random.randint(jax.random.fold_in(k_ids, 2), (B, L), 0, DIRECTION_VOCAB),
        jax.random.randint(jax.random.fold_in(k_ids, 3), (B, L), 0, HOUR_VOCAB),
    ], axis=-1).astype(jnp.float32)
    tfeat = jax.random.normal(k_tf, (B, L, 2), jnp.float32)
    x_mark = jnp.concatenate([ids, tfeat], axis=-1)        # (B, L, 6), float like torch

    pe = positional_encoding(L, d_model)

    out = data_embedding(x, x_mark, pe, conv_w, conv_b, lin_w, lin_b,
                         route_tbl, station_tbl, direc_tbl, hour_tbl)
    out = jax.block_until_ready(out)

    ref = _reference(x, x_mark, pe, conv_w, conv_b, lin_w, lin_b,
                     route_tbl, station_tbl, direc_tbl, hour_tbl)
    assert out.shape == (B, L, d_model)
    assert jnp.allclose(out, ref, atol=1e-3, rtol=1e-3), "mismatch vs reference"

    print("KERNEL_OK")
</pallas_src>

<mosaic_0001>
module attributes {stable_mosaic.version = 11 : i64} {
  func.func @_data_embedding_kernel(%arg0: i32, %arg1: i32, %arg2: memref<16xi32, #tpu.memory_space<smem>>, %arg3: memref<16xi32, #tpu.memory_space<smem>>, %arg4: memref<1x8x14xf32, #tpu.memory_space<vmem>>, %arg5: memref<1x8x2xi32, #tpu.memory_space<vmem>>, %arg6: memref<8x128xf32, #tpu.memory_space<vmem>>, %arg7: memref<14x128xf32, #tpu.memory_space<vmem>>, %arg8: memref<32x128xf32, #tpu.memory_space<vmem>>, %arg9: memref<2602x128xf32, #tpu.memory_space<vmem>>, %arg10: memref<37689x128xf32, #tpu.memory_space<vmem>>, %arg11: memref<1x8x128xf32, #tpu.memory_space<vmem>>, %arg12: memref<8x128xf32, #tpu.memory_space<vmem>>) attributes {dimension_semantics = [#tpu.dimension_semantics<parallel>, #tpu.dimension_semantics<parallel>], iteration_bounds = array<i64: 2, 1>, scalar_prefetch = 2 : i64, scratch_operands = 1 : i64, tpu.core_type = #tpu.core_type<tc>, window_params = [{transform_indices = @transform_0, window_bounds = array<i64: 1, 8, 14>}, {transform_indices = @transform_1, window_bounds = array<i64: 1, 8, 2>}, {transform_indices = @transform_2, window_bounds = array<i64: 8, 128>}, {pipeline_mode = #tpu.pipeline_mode<synchronous>, transform_indices = @transform_3, window_bounds = array<i64: 14, 128>}, {pipeline_mode = #tpu.pipeline_mode<synchronous>, transform_indices = @transform_4, window_bounds = array<i64: 32, 128>}, {pipeline_mode = #tpu.pipeline_mode<synchronous>, transform_indices = @transform_5, window_bounds = array<i64: 2602, 128>}, {pipeline_mode = #tpu.pipeline_mode<synchronous>, transform_indices = @transform_6, window_bounds = array<i64: 37689, 128>}, {transform_indices = @transform_7, window_bounds = array<i64: 1, 8, 128>}]} {
    %c1_i32 = arith.constant 1 : i32
    %0 = arith.muli %arg0, %c1_i32 : i32
    %1 = arith.addi %0, %arg1 : i32
    %c8_i32 = arith.constant 8 : i32
    %2 = arith.muli %1, %c8_i32 : i32
    %c0 = arith.constant 0 : index
    %c0_0 = arith.constant 0 : index
    %c0_1 = arith.constant 0 : index
    %3 = vector.load %arg4[%c0, %c0_0, %c0_1] : memref<1x8x14xf32, #tpu.memory_space<vmem>>, vector<1x8x14xf32>
    %4 = vector.shape_cast %3 : vector<1x8x14xf32> to vector<8x14xf32>
    %c0_2 = arith.constant 0 : index
    %c0_3 = arith.constant 0 : index
    %5 = vector.load %arg7[%c0_2, %c0_3] : memref<14x128xf32, #tpu.memory_space<vmem>>, vector<14x128xf32>
    %cst = arith.constant dense<0.000000e+00> : vector<8x128xf32>
    %6 = tpu.matmul %4, %5, %cst {dimension_numbers = #tpu.dot_dimension_numbers<[1], [0], [0], [1], [0, 0, 1, 1], [], []>} : vector<8x14xf32>, vector<14x128xf32>, vector<8x128xf32> -> vector<8x128xf32>
    %c0_4 = arith.constant 0 : index
    %c0_5 = arith.constant 0 : index
    %c0_6 = arith.constant 0 : index
    %7 = vector.load %arg5[%c0_4, %c0_5, %c0_6] : memref<1x8x2xi32, #tpu.memory_space<vmem>>, vector<1x8x2xi32>
    %8 = vector.shape_cast %7 : vector<1x8x2xi32> to vector<8x2xi32>
    %9 = vector.extract_strided_slice %8 {offsets = [0, 0], sizes = [8, 1], strides = [1, 1]} : vector<8x2xi32> to vector<8x1xi32>
    %10 = vector.extract_strided_slice %8 {offsets = [0, 1], sizes = [8, 1], strides = [1, 1]} : vector<8x2xi32> to vector<8x1xi32>
    %c2_i32 = arith.constant 2 : i32
    %11 = vector.broadcast %c2_i32 : i32 to vector<8x1xi32>
    %12 = arith.addi %10, %11 : vector<8x1xi32>
    %13 = tpu.iota {dimensions = array<i32: 1>} : vector<8x32xi32>
    %14 = vector.broadcast %9 : vector<8x1xi32> to vector<8x32xi32>
    %15 = arith.cmpi eq, %13, %14 : vector<8x32xi32>
    %16 = vector.broadcast %12 : vector<8x1xi32> to vector<8x32xi32>
    %17 = arith.cmpi eq, %13, %16 : vector<8x32xi32>
    %18 = arith.ori %15, %17 : vector<8x32xi1>
    %19 = arith.extui %18 : vector<8x32xi1> to vector<8x32xi32>
    %20 = arith.sitofp %19 : vector<8x32xi32> to vector<8x32xf32>
    %c0_7 = arith.constant 0 : index
    %c0_8 = arith.constant 0 : index
    %21 = vector.load %arg8[%c0_7, %c0_8] : memref<32x128xf32, #tpu.memory_space<vmem>>, vector<32x128xf32>
    %cst_9 = arith.constant dense<0.000000e+00> : vector<8x128xf32>
    %22 = tpu.matmul %20, %21, %cst_9 {dimension_numbers = #tpu.dot_dimension_numbers<[1], [0], [0], [1], [0, 0, 1, 1], [], []>} : vector<8x32xf32>, vector<32x128xf32>, vector<8x128xf32> -> vector<8x128xf32>
    %c0_i32 = arith.constant 0 : i32
    %23 = arith.addi %2, %c0_i32 : i32
    %24 = arith.index_cast %23 : i32 to index
    %25 = memref.load %arg2[%24] : memref<16xi32, #tpu.memory_space<smem>>
    %26 = arith.index_cast %25 : i32 to index
    %c0_10 = arith.constant 0 : index
    %27 = vector.load %arg9[%26, %c0_10] : memref<2602x128xf32, #tpu.memory_space<vmem>>, vector<1x128xf32>
    %28 = arith.addi %2, %c0_i32 : i32
    %29 = arith.index_cast %28 : i32 to index
    %30 = memref.load %arg3[%29] : memref<16xi32, #tpu.memory_space<smem>>
    %31 = arith.index_cast %30 : i32 to index
    %c0_11 = arith.constant 0 : index
    %32 = vector.load %arg10[%31, %c0_11] : memref<37689x128xf32, #tpu.memory_space<vmem>>, vector<1x128xf32>
    %33 = arith.addf %27, %32 : vector<1x128xf32>
    %34 = arith.index_cast %c0_i32 : i32 to index
    %c0_12 = arith.constant 0 : index
    %35 = vector.load %arg12[%34, %c0_12] : memref<8x128xf32, #tpu.memory_space<vmem>>, vector<1x128xf32>
    tpu.vector_store %arg12[%34, %c0_12], %33 {strides = array<i32>} : memref<8x128xf32, #tpu.memory_space<vmem>>, vector<1x128xf32>,
    %c1_i32_13 = arith.constant 1 : i32
    %36 = arith.addi %2, %c1_i32_13 : i32
    %37 = arith.index_cast %36 : i32 to index
    %38 = memref.load %arg2[%37] : memref<16xi32, #tpu.memory_space<smem>>
    %39 = arith.index_cast %38 : i32 to index
    %c0_14 = arith.constant 0 : index
    %40 = vector.load %arg9[%39, %c0_14] : memref<2602x128xf32, #tpu.memory_space<vmem>>, vector<1x128xf32>
    %41 = arith.addi %2, %c1_i32_13 : i32
    %42 = arith.index_cast %41 : i32 to index
    %43 = memref.load %arg3[%42] : memref<16xi32, #tpu.memory_space<smem>>
    %44 = arith.index_cast %43 : i32 to index
    %c0_15 = arith.constant 0 : index
    %45 = vector.load %arg10[%44, %c0_15] : memref<37689x128xf32, #tpu.memory_space<vmem>>, vector<1x128xf32>
    %46 = arith.addf %40, %45 : vector<1x128xf32>
    %47 = arith.index_cast %c1_i32_13 : i32 to index
    %c0_16 = arith.constant 0 : index
    %48 = vector.load %arg12[%47, %c0_16] : memref<8x128xf32, #tpu.memory_space<vmem>>, vector<1x128xf32>
    tpu.vector_store %arg12[%47, %c0_16], %46 {strides = array<i32>} : memref<8x128xf32, #tpu.memory_space<vmem>>, vector<1x128xf32>,
    %c2_i32_17 = arith.constant 2 : i32
    %49 = arith.addi %2, %c2_i32_17 : i32
    %50 = arith.index_cast %49 : i32 to index
    %51 = memref.load %arg2[%50] : memref<16xi32, #tpu.memory_space<smem>>
    %52 = arith.index_cast %51 : i32 to index
    %c0_18 = arith.constant 0 : index
    %53 = vector.load %arg9[%52, %c0_18] : memref<2602x128xf32, #tpu.memory_space<vmem>>, vector<1x128xf32>
    %54 = arith.addi %2, %c2_i32_17 : i32
    %55 = arith.index_cast %54 : i32 to index
    %56 = memref.load %arg3[%55] : memref<16xi32, #tpu.memory_space<smem>>
    %57 = arith.index_cast %56 : i32 to index
    %c0_19 = arith.constant 0 : index
    %58 = vector.load %arg10[%57, %c0_19] : memref<37689x128xf32, #tpu.memory_space<vmem>>, vector<1x128xf32>
    %59 = arith.addf %53, %58 : vector<1x128xf32>
    %60 = arith.index_cast %c2_i32_17 : i32 to index
    %c0_20 = arith.constant 0 : index
    %61 = vector.load %arg12[%60, %c0_20] : memref<8x128xf32, #tpu.memory_space<vmem>>, vector<1x128xf32>
    tpu.vector_store %arg12[%60, %c0_20], %59 {strides = array<i32>} : memref<8x128xf32, #tpu.memory_space<vmem>>, vector<1x128xf32>,
    %c3_i32 = arith.constant 3 : i32
    %62 = arith.addi %2, %c3_i32 : i32
    %63 = arith.index_cast %62 : i32 to index
    %64 = memref.load %arg2[%63] : memref<16xi32, #tpu.memory_space<smem>>
    %65 = arith.index_cast %64 : i32 to index
    %c0_21 = arith.constant 0 : index
    %66 = vector.load %arg9[%65, %c0_21] : memref<2602x128xf32, #tpu.memory_space<vmem>>, vector<1x128xf32>
    %67 = arith.addi %2, %c3_i32 : i32
    %68 = arith.index_cast %67 : i32 to index
    %69 = memref.load %arg3[%68] : memref<16xi32, #tpu.memory_space<smem>>
    %70 = arith.index_cast %69 : i32 to index
    %c0_22 = arith.constant 0 : index
    %71 = vector.load %arg10[%70, %c0_22] : memref<37689x128xf32, #tpu.memory_space<vmem>>, vector<1x128xf32>
    %72 = arith.addf %66, %71 : vector<1x128xf32>
    %73 = arith.index_cast %c3_i32 : i32 to index
    %c0_23 = arith.constant 0 : index
    %74 = vector.load %arg12[%73, %c0_23] : memref<8x128xf32, #tpu.memory_space<vmem>>, vector<1x128xf32>
    tpu.vector_store %arg12[%73, %c0_23], %72 {strides = array<i32>} : memref<8x128xf32, #tpu.memory_space<vmem>>, vector<1x128xf32>,
    %c4_i32 = arith.constant 4 : i32
    %75 = arith.addi %2, %c4_i32 : i32
    %76 = arith.index_cast %75 : i32 to index
    %77 = memref.load %arg2[%76] : memref<16xi32, #tpu.memory_space<smem>>
    %78 = arith.index_cast %77 : i32 to index
    %c0_24 = arith.constant 0 : index
    %79 = vector.load %arg9[%78, %c0_24] : memref<2602x128xf32, #tpu.memory_space<vmem>>, vector<1x128xf32>
    %80 = arith.addi %2, %c4_i32 : i32
    %81 = arith.index_cast %80 : i32 to index
    %82 = memref.load %arg3[%81] : memref<16xi32, #tpu.memory_space<smem>>
    %83 = arith.index_cast %82 : i32 to index
    %c0_25 = arith.constant 0 : index
    %84 = vector.load %arg10[%83, %c0_25] : memref<37689x128xf32, #tpu.memory_space<vmem>>, vector<1x128xf32>
    %85 = arith.addf %79, %84 : vector<1x128xf32>
    %86 = arith.index_cast %c4_i32 : i32 to index
    %c0_26 = arith.constant 0 : index
    %87 = vector.load %arg12[%86, %c0_26] : memref<8x128xf32, #tpu.memory_space<vmem>>, vector<1x128xf32>
    tpu.vector_store %arg12[%86, %c0_26], %85 {strides = array<i32>} : memref<8x128xf32, #tpu.memory_space<vmem>>, vector<1x128xf32>,
    %c5_i32 = arith.constant 5 : i32
    %88 = arith.addi %2, %c5_i32 : i32
    %89 = arith.index_cast %88 : i32 to index
    %90 = memref.load %arg2[%89] : memref<16xi32, #tpu.memory_space<smem>>
    %91 = arith.index_cast %90 : i32 to index
    %c0_27 = arith.constant 0 : index
    %92 = vector.load %arg9[%91, %c0_27] : memref<2602x128xf32, #tpu.memory_space<vmem>>, vector<1x128xf32>
    %93 = arith.addi %2, %c5_i32 : i32
    %94 = arith.index_cast %93 : i32 to index
    %95 = memref.load %arg3[%94] : memref<16xi32, #tpu.memory_space<smem>>
    %96 = arith.index_cast %95 : i32 to index
    %c0_28 = arith.constant 0 : index
    %97 = vector.load %arg10[%96, %c0_28] : memref<37689x128xf32, #tpu.memory_space<vmem>>, vector<1x128xf32>
    %98 = arith.addf %92, %97 : vector<1x128xf32>
    %99 = arith.index_cast %c5_i32 : i32 to index
    %c0_29 = arith.constant 0 : index
    %100 = vector.load %arg12[%99, %c0_29] : memref<8x128xf32, #tpu.memory_space<vmem>>, vector<1x128xf32>
    tpu.vector_store %arg12[%99, %c0_29], %98 {strides = array<i32>} : memref<8x128xf32, #tpu.memory_space<vmem>>, vector<1x128xf32>,
    %c6_i32 = arith.constant 6 : i32
    %101 = arith.addi %2, %c6_i32 : i32
    %102 = arith.index_cast %101 : i32 to index
    %103 = memref.load %arg2[%102] : memref<16xi32, #tpu.memory_space<smem>>
    %104 = arith.index_cast %103 : i32 to index
    %c0_30 = arith.constant 0 : index
    %105 = vector.load %arg9[%104, %c0_30] : memref<2602x128xf32, #tpu.memory_space<vmem>>, vector<1x128xf32>
    %106 = arith.addi %2, %c6_i32 : i32
    %107 = arith.index_cast %106 : i32 to index
    %108 = memref.load %arg3[%107] : memref<16xi32, #tpu.memory_space<smem>>
    %109 = arith.index_cast %108 : i32 to index
    %c0_31 = arith.constant 0 : index
    %110 = vector.load %arg10[%109, %c0_31] : memref<37689x128xf32, #tpu.memory_space<vmem>>, vector<1x128xf32>
    %111 = arith.addf %105, %110 : vector<1x128xf32>
    %112 = arith.index_cast %c6_i32 : i32 to index
    %c0_32 = arith.constant 0 : index
    %113 = vector.load %arg12[%112, %c0_32] : memref<8x128xf32, #tpu.memory_space<vmem>>, vector<1x128xf32>
    tpu.vector_store %arg12[%112, %c0_32], %111 {strides = array<i32>} : memref<8x128xf32, #tpu.memory_space<vmem>>, vector<1x128xf32>,
    %c7_i32 = arith.constant 7 : i32
    %114 = arith.addi %2, %c7_i32 : i32
    %115 = arith.index_cast %114 : i32 to index
    %116 = memref.load %arg2[%115] : memref<16xi32, #tpu.memory_space<smem>>
    %117 = arith.index_cast %116 : i32 to index
    %c0_33 = arith.constant 0 : index
    %118 = vector.load %arg9[%117, %c0_33] : memref<2602x128xf32, #tpu.memory_space<vmem>>, vector<1x128xf32>
    %119 = arith.addi %2, %c7_i32 : i32
    %120 = arith.index_cast %119 : i32 to index
    %121 = memref.load %arg3[%120] : memref<16xi32, #tpu.memory_space<smem>>
    %122 = arith.index_cast %121 : i32 to index
    %c0_34 = arith.constant 0 : index
    %123 = vector.load %arg10[%122, %c0_34] : memref<37689x128xf32, #tpu.memory_space<vmem>>, vector<1x128xf32>
    %124 = arith.addf %118, %123 : vector<1x128xf32>
    %125 = arith.index_cast %c7_i32 : i32 to index
    %c0_35 = arith.constant 0 : index
    %126 = vector.load %arg12[%125, %c0_35] : memref<8x128xf32, #tpu.memory_space<vmem>>, vector<1x128xf32>
    tpu.vector_store %arg12[%125, %c0_35], %124 {strides = array<i32>} : memref<8x128xf32, #tpu.memory_space<vmem>>, vector<1x128xf32>,
    %c8_i32_36 = arith.constant 8 : i32
    %c0_37 = arith.constant 0 : index
    %c0_38 = arith.constant 0 : index
    %127 = vector.load %arg6[%c0_37, %c0_38] : memref<8x128xf32, #tpu.memory_space<vmem>>, vector<8x128xf32>
    %128 = arith.addf %6, %127 : vector<8x128xf32>
    %129 = arith.addf %128, %22 : vector<8x128xf32>
    %c0_39 = arith.constant 0 : index
    %c0_40 = arith.constant 0 : index
    %130 = vector.load %arg12[%c0_39, %c0_40] : memref<8x128xf32, #tpu.memory_space<vmem>>, vector<8x128xf32>
    %131 = arith.addf %129, %130 : vector<8x128xf32>
    %c0_41 = arith.constant 0 : index
    %c0_42 = arith.constant 0 : index
    %c0_43 = arith.constant 0 : index
    %132 = vector.load %arg11[%c0_41, %c0_42, %c0_43] : memref<1x8x128xf32, #tpu.memory_space<vmem>>, vector<1x8x128xf32>
    %133 = vector.shape_cast %132 : vector<1x8x128xf32> to vector<8x128xf32>
    %134 = vector.shape_cast %131 : vector<8x128xf32> to vector<1x8x128xf32>
    tpu.vector_store %arg11[%c0_41, %c0_42, %c0_43], %134 {strides = array<i32>} : memref<1x8x128xf32, #tpu.memory_space<vmem>>, vector<1x8x128xf32>,
    return
  }
  func.func @transform_0(%arg0: i32, %arg1: i32, %arg2: memref<16xi32, #tpu.memory_space<smem>>, %arg3: memref<16xi32, #tpu.memory_space<smem>>) -> (i32, i32, i32) {
    %c0_i32 = arith.constant 0 : i32
    %c0_i32_0 = arith.constant 0 : i32
    return %arg0, %arg1, %c0_i32 : i32, i32, i32
  }
  func.func @transform_1(%arg0: i32, %arg1: i32, %arg2: memref<16xi32, #tpu.memory_space<smem>>, %arg3: memref<16xi32, #tpu.memory_space<smem>>) -> (i32, i32, i32) {
    %c0_i32 = arith.constant 0 : i32
    %c0_i32_0 = arith.constant 0 : i32
    return %arg0, %arg1, %c0_i32 : i32, i32, i32
  }
  func.func @transform_2(%arg0: i32, %arg1: i32, %arg2: memref<16xi32, #tpu.memory_space<smem>>, %arg3: memref<16xi32, #tpu.memory_space<smem>>) -> (i32, i32) {
    %c0_i32 = arith.constant 0 : i32
    %c0_i32_0 = arith.constant 0 : i32
    return %arg1, %c0_i32 : i32, i32
  }
  func.func @transform_3(%arg0: i32, %arg1: i32, %arg2: memref<16xi32, #tpu.memory_space<smem>>, %arg3: memref<16xi32, #tpu.memory_space<smem>>) -> (i32, i32) {
    %c0_i32 = arith.constant 0 : i32
    %c0_i32_0 = arith.constant 0 : i32
    %c0_i32_1 = arith.constant 0 : i32
    return %c0_i32, %c0_i32_0 : i32, i32
  }
  func.func @transform_4(%arg0: i32, %arg1: i32, %arg2: memref<16xi32, #tpu.memory_space<smem>>, %arg3: memref<16xi32, #tpu.memory_space<smem>>) -> (i32, i32) {
    %c0_i32 = arith.constant 0 : i32
    %c0_i32_0 = arith.constant 0 : i32
    %c0_i32_1 = arith.constant 0 : i32
    return %c0_i32, %c0_i32_0 : i32, i32
  }
  func.func @transform_5(%arg0: i32, %arg1: i32, %arg2: memref<16xi32, #tpu.memory_space<smem>>, %arg3: memref<16xi32, #tpu.memory_space<smem>>) -> (i32, i32) {
    %c0_i32 = arith.constant 0 : i32
    %c0_i32_0 = arith.constant 0 : i32
    %c0_i32_1 = arith.constant 0 : i32
    return %c0_i32, %c0_i32_0 : i32, i32
  }
  func.func @transform_6(%arg0: i32, %arg1: i32, %arg2: memref<16xi32, #tpu.memory_space<smem>>, %arg3: memref<16xi32, #tpu.memory_space<smem>>) -> (i32, i32) {
    %c0_i32 = arith.constant 0 : i32
    %c0_i32_0 = arith.constant 0 : i32
    %c0_i32_1 = arith.constant 0 : i32
    return %c0_i32, %c0_i32_0 : i32, i32
  }
  func.func @transform_7(%arg0: i32, %arg1: i32, %arg2: memref<16xi32, #tpu.memory_space<smem>>, %arg3: memref<16xi32, #tpu.memory_space<smem>>) -> (i32, i32, i32) {
    %c0_i32 = arith.constant 0 : i32
    %c0_i32_0 = arith.constant 0 : i32
    return %arg0, %arg1, %c0_i32 : i32, i32, i32
  }
}

</mosaic_0001>

<llo_original>
// kernel: tpu_custom_call.1
$region0: #{tpu_custom_call.1}
  #allocation0 [shape = 'u32[]', space=smem, size = 0x4, offset = 0x4, fixed_abs, tag = 'smem constant byte address 0x4 - core index']
  #allocation1 [shape = 'u32[144,128]{1,0:T(1,128)}', space=vmem, size = 0x12000, scoped, tag = 'internal scratch']
  #allocation2 [shape = 'f32[8,128]{1,0:T(8,128)}', space=vmem, size = 0x1000, scoped, tag = 'scratch operand']
  #allocation3 [shape = 's32[1]{0}', space=sflag, size = 0x4, scoped, tag = 'scoped memory for tpu_custom_call.1']
  #allocation4 [shape = 'u8[512]{0}', space=smem, size = 0x200, scoped, tag = 'prefetched SMEM operand 0']
  #allocation5 [shape = 'u8[512]{0}', space=smem, size = 0x200, scoped, tag = 'prefetched SMEM operand 1']
  %s0 = inlined_call_operand.hbm [shape: s32[16], index: 0, kind: input, shape index: {}]
  %s1 = inlined_call_operand.hbm [shape: s32[16], index: 1, kind: input, shape index: {}]
  %s2 = inlined_call_operand.hbm [shape: f32[2,8,14], index: 2, kind: input, shape index: {}]
  %s3 = inlined_call_operand.vmem [shape: s32[2,8,2], index: 3, kind: input, shape index: {}]
  %s4 = inlined_call_operand.hbm [shape: f32[8,128], index: 4, kind: input, shape index: {}]
  %s5 = inlined_call_operand.hbm [shape: f32[14,128], index: 5, kind: input, shape index: {}]
  %s6 = inlined_call_operand.hbm [shape: f32[32,128], index: 6, kind: input, shape index: {}]
  %s7 = inlined_call_operand.hbm [shape: f32[2602,128], index: 7, kind: input, shape index: {}]
  %s8 = inlined_call_operand.hbm [shape: f32[37689,128], index: 8, kind: input, shape index: {}]
  %s9 = inlined_call_operand.hbm [shape: f32[2,8,128], index: 9, kind: output, shape index: {}]
  %s10 = sld [smem:[#allocation0]]
  $region85: #{tpu_custom_call.1} parent=0
    _
  %s12 = ssub.s32 1, %s10
  %s13 = scalar_select 0, %s12, %s10
  %15 = dma.hbm_to_smem %s0, 16, [#allocation4], [#allocation3]
  %17 = dma.hbm_to_smem %s1, 16, [#allocation5], [#allocation3]
  %18 = dma.done [#allocation3], 32
  %19 = sfence
  $region1: #{tpu_custom_call.1} parent=0
    #allocation6 [shape = 'u8[8192]{0}', space=vmem, size = 0x2000, scoped, tag = 'input window, operand 2']
    #allocation7 [shape = 's32[2]{0}', space=sflag, size = 0x8, scoped, tag = 'scoped memory for tpu_custom_call.1']
    #allocation8 [shape = 's32[2]{0}', space=sflag, size = 0x8, scoped, tag = 'scoped memory for tpu_custom_call.1']
    #allocation9 [shape = 'u8[4096]{0}', space=vmem, size = 0x1000, scoped, tag = 'input window, operand 4, single buffered']
    #allocation10 [shape = 's32[1]{0}', space=sflag, size = 0x4, scoped, tag = 'scoped memory for tpu_custom_call.1']
    #allocation11 [shape = 'u8[8192]{0}', space=vmem, size = 0x2000, scoped, tag = 'input window, operand 5, single buffered']
    #allocation12 [shape = 'u8[16384]{0}', space=vmem, size = 0x4000, scoped, tag = 'input window, operand 6, single buffered']
    #allocation13 [shape = 's32[1]{0}', space=sflag, size = 0x4, scoped, tag = 'scoped memory for tpu_custom_call.1']
    #allocation14 [shape = 'u8[1335296]{0}', space=vmem, size = 0x146000, scoped, tag = 'input window, operand 7, single buffered']
    #allocation15 [shape = 'u8[19300352]{0}', space=vmem, size = 0x1268000, scoped, tag = 'input window, operand 8, single buffered']
    #allocation16 [shape = 's32[1]{0}', space=sflag, size = 0x4, scoped, tag = 'scoped memory for tpu_custom_call.1']
    #allocation17 [shape = 'u8[8192]{0}', space=vmem, size = 0x2000, scoped, tag = 'output window, operand 0']
    %20 = vsyncpa [#allocation7], 0
    %s21 = scalar_lea.sflag [#allocation7], 1
    %22 = vsyncpa %s21, 0
    %23 = vsyncpa [#allocation10], 0
    %24 = vsyncpa [#allocation13], 0
    %25 = vsyncpa [#allocation16], 0
    %26 = vsyncpa [#allocation8], 0
    %s27 = scalar_lea.sflag [#allocation8], 1
    %28 = vsyncpa %s27, 0
    loop: start=0, step=1, limit=4
    $region2: #{tpu_custom_call.1} parent=1 // loop_pre_header
      _
    $region3: #{tpu_custom_call.1} parent=1 // loop_header
      %s30 = sphi 0, %s34
      %p31 = scmp.ge.s32.totalorder %s30, 4
      %s37 = sphi 0, %s49
      %s38 = sphi 0, %s45
      %s39 = sphi 0, %s37
      %s40 = sphi 0, %s38
      %s41 = sphi 0, %s39
      %s42 = sphi 0, %s40
      %s54 = sphi 0, %s56
      %s57 = sphi 0, %s54
      %s58 = sphi 0, %s57
      %s74 = sphi 0, %s58
      %s82 = sphi 0, %s84
      %s85 = sphi 0, %s82
      %s86 = sphi 0, %s85
      %s102 = sphi 0, %s86
      %s108 = sphi 0, %s110
      %s111 = sphi 0, %s108
      %s112 = sphi 0, %s111
      %s128 = sphi 0, %s112
      %s132 = sphi 0, %s132
      %s134 = sphi 0, %s132
      %s135 = sphi 0, %s134
      %s149 = sphi 0, %s135
      %s153 = sphi 0, %s153
      %s155 = sphi 0, %s153
      %s156 = sphi 0, %s155
      %s170 = sphi 0, %s156
      %s174 = sphi 0, %s174
      %s176 = sphi 0, %s174
      %s177 = sphi 0, %s176
      %s191 = sphi 0, %s177
      %s195 = sphi 0, %s195
      %s197 = sphi 0, %s195
      %s198 = sphi 0, %s197
      %s212 = sphi 0, %s198
      %s220 = sphi 0, %s222
      %s223 = sphi 0, %s220
      %s224 = sphi 0, %s223
      %s240 = sphi 0, %s224
    $region4: #{tpu_custom_call.1} parent=1 // loop_header_branch
      %33 = sbr.rel (%p31) target = $region8
    $region5: #{tpu_custom_call.1} parent=1 // loop_body
      %s35 = ssub.s32 %s30, 1
      %s36 = ssub.s32 %s30, 2
      %s43 = sadd.s32 1, %s38
      %p44 = scmp.ge.s32.totalorder %s43, 1
      %s45 = scalar_select %p44, 0, %s43
      %s46 = sadd.s32 1, %s37
      %s47 = scalar_select %p44, %s46, %s37
      %p48 = scmp.ge.s32.totalorder %s47, 2
      %s49 = scalar_select %p48, 0, %s47
      %s50 = ssub.s32 %s37, %s49
      %s51 = ssub.s32 %s38, %s45
      %s52 = sor.u32 %s50, %s51
      %p53 = scmp.eq.s32.totalorder %s52, 0
      %s55 = sadd.s32 %s54, 1
      %s56 = scalar_select %p53, %s54, %s55
      %p59 = pneg %p53
      %p60 = scmp.eq.s32.totalorder %s30, 1
      %p61 = por %p59, %p60
      %p62 = scmp.ne.s32.totalorder %s54, %s57
      %p63 = scmp.eq.s32.totalorder %s30, 0
      %p64 = por %p62, %p63
      %p65 = scmp.ne.s32.totalorder %s54, %s57
      %p66 = scmp.eq.s32.totalorder %s35, 1
      %p67 = por %p65, %p66
      %p68 = scmp.ne.s32.totalorder %s57, %s58
      %p69 = scmp.eq.s32.totalorder %s35, 0
      %p70 = por %p68, %p69
      %p71 = scmp.ne.s32.totalorder %s57, %s58
      %p72 = scmp.eq.s32.totalorder %s36, 1
      %p73 = por %p71, %p72
      %p75 = scmp.ne.s32.totalorder %s58, %s74
      %p76 = scmp.eq.s32.totalorder %s36, 0
      %p77 = por %p75, %p76
      %s78 = ssub.s32 %s37, %s49
      %s79 = ssub.s32 %s38, %s45
      %s80 = sor.u32 %s78, %s79
      %p81 = scmp.eq.s32.totalorder %s80, 0
      %s83 = sadd.s32 %s82, 1
      %s84 = scalar_select %p81, %s82, %s83
      %p87 = pneg %p81
      %p88 = scmp.eq.s32.totalorder %s30, 1
      %p89 = por %p87, %p88
      %p90 = scmp.ne.s32.totalorder %s82, %s85
      %p91 = scmp.eq.s32.totalorder %s30, 0
      %p92 = por %p90, %p91
      %p93 = scmp.ne.s32.totalorder %s82, %s85
      %p94 = scmp.eq.s32.totalorder %s35, 1
      %p95 = por %p93, %p94
      %p96 = scmp.ne.s32.totalorder %s85, %s86
      %p97 = scmp.eq.s32.totalorder %s35, 0
      %p98 = por %p96, %p97
      %p99 = scmp.ne.s32.totalorder %s85, %s86
      %p100 = scmp.eq.s32.totalorder %s36, 1
      %p101 = por %p99, %p100
      %p103 = scmp.ne.s32.totalorder %s86, %s102
      %p104 = scmp.eq.s32.totalorder %s36, 0
      %p105 = por %p103, %p104
      %s106 = ssub.s32 %s38, %s45
      %p107 = scmp.eq.s32.totalorder %s106, 0
      %s109 = sadd.s32 %s108, 1
      %s110 = scalar_select %p107, %s108, %s109
      %p113 = pneg %p107
      %p114 = scmp.eq.s32.totalorder %s30, 1
      %p115 = por %p113, %p114
      %p116 = scmp.ne.s32.totalorder %s108, %s111
      %p117 = scmp.eq.s32.totalorder %s30, 0
      %p118 = por %p116, %p117
      %p119 = scmp.ne.s32.totalorder %s108, %s111
      %p120 = scmp.eq.s32.totalorder %s35, 1
      %p121 = por %p119, %p120
      %p122 = scmp.ne.s32.totalorder %s111, %s112
      %p123 = scmp.eq.s32.totalorder %s35, 0
      %p124 = por %p122, %p123
      %p125 = scmp.ne.s32.totalorder %s111, %s112
      %p126 = scmp.eq.s32.totalorder %s36, 1
      %p127 = por %p125, %p126
      %p129 = scmp.ne.s32.totalorder %s112, %s128
      %p130 = scmp.eq.s32.totalorder %s36, 0
      %p131 = por %p129, %p130
      %s133 = sadd.s32 %s132, 1
      %p136 = scmp.eq.s32.totalorder %s30, 1
      %p137 = scmp.ne.s32.totalorder %s132, %s134
      %p138 = scmp.eq.s32.totalorder %s30, 0
      %p139 = por %p137, %p138
      %p140 = scmp.ne.s32.totalorder %s132, %s134
      %p141 = scmp.eq.s32.totalorder %s35, 1
      %p142 = por %p140, %p141
      %p143 = scmp.ne.s32.totalorder %s134, %s135
      %p144 = scmp.eq.s32.totalorder %s35, 0
      %p145 = por %p143, %p144
      %p146 = scmp.ne.s32.totalorder %s134, %s135
      %p147 = scmp.eq.s32.totalorder %s36, 1
      %p148 = por %p146, %p147
      %p150 = scmp.ne.s32.totalorder %s135, %s149
      %p151 = scmp.eq.s32.totalorder %s36, 0
      %p152 = por %p150, %p151
      %s154 = sadd.s32 %s153, 1
      %p157 = scmp.eq.s32.totalorder %s30, 1
      %p158 = scmp.ne.s32.totalorder %s153, %s155
      %p159 = scmp.eq.s32.totalorder %s30, 0
      %p160 = por %p158, %p159
      %p161 = scmp.ne.s32.totalorder %s153, %s155
      %p162 = scmp.eq.s32.totalorder %s35, 1
      %p163 = por %p161, %p162
      %p164 = scmp.ne.s32.totalorder %s155, %s156
      %p165 = scmp.eq.s32.totalorder %s35, 0
      %p166 = por %p164, %p165
      %p167 = scmp.ne.s32.totalorder %s155, %s156
      %p168 = scmp.eq.s32.totalorder %s36, 1
      %p169 = por %p167, %p168
      %p171 = scmp.ne.s32.totalorder %s156, %s170
      %p172 = scmp.eq.s32.totalorder %s36, 0
      %p173 = por %p171, %p172
      %s175 = sadd.s32 %s174, 1
      %p178 = scmp.eq.s32.totalorder %s30, 1
      %p179 = scmp.ne.s32.totalorder %s174, %s176
      %p180 = scmp.eq.s32.totalorder %s30, 0
      %p181 = por %p179, %p180
      %p182 = scmp.ne.s32.totalorder %s174, %s176
      %p183 = scmp.eq.s32.totalorder %s35, 1
      %p184 = por %p182, %p183
      %p185 = scmp.ne.s32.totalorder %s176, %s177
      %p186 = scmp.eq.s32.totalorder %s35, 0
      %p187 = por %p185, %p186
      %p188 = scmp.ne.s32.totalorder %s176, %s177
      %p189 = scmp.eq.s32.totalorder %s36, 1
      %p190 = por %p188, %p189
      %p192 = scmp.ne.s32.totalorder %s177, %s191
      %p193 = scmp.eq.s32.totalorder %s36, 0
      %p194 = por %p192, %p193
      %s196 = sadd.s32 %s195, 1
      %p199 = scmp.eq.s32.totalorder %s30, 1
      %p200 = scmp.ne.s32.totalorder %s195, %s197
      %p201 = scmp.eq.s32.totalorder %s30, 0
      %p202 = por %p200, %p201
      %p203 = scmp.ne.s32.totalorder %s195, %s197
      %p204 = scmp.eq.s32.totalorder %s35, 1
      %p205 = por %p203, %p204
      %p206 = scmp.ne.s32.totalorder %s197, %s198
      %p207 = scmp.eq.s32.totalorder %s35, 0
      %p208 = por %p206, %p207
      %p209 = scmp.ne.s32.totalorder %s197, %s198
      %p210 = scmp.eq.s32.totalorder %s36, 1
      %p211 = por %p209, %p210
      %p213 = scmp.ne.s32.totalorder %s198, %s212
      %p214 = scmp.eq.s32.totalorder %s36, 0
      %p215 = por %p213, %p214
      %s216 = ssub.s32 %s37, %s49
      %s217 = ssub.s32 %s38, %s45
      %s218 = sor.u32 %s216, %s217
      %p219 = scmp.eq.s32.totalorder %s218, 0
      %s221 = sadd.s32 %s220, 1
      %s222 = scalar_select %p219, %s220, %s221
      %p225 = pneg %p219
      %p226 = scmp.eq.s32.totalorder %s30, 1
      %p227 = por %p225, %p226
      %p228 = scmp.ne.s32.totalorder %s220, %s223
      %p229 = scmp.eq.s32.totalorder %s30, 0
      %p230 = por %p228, %p229
      %p231 = scmp.ne.s32.totalorder %s220, %s223
      %p232 = scmp.eq.s32.totalorder %s35, 1
      %p233 = por %p231, %p232
      %p234 = scmp.ne.s32.totalorder %s223, %s224
      %p235 = scmp.eq.s32.totalorder %s35, 0
      %p236 = por %p234, %p235
      %p237 = scmp.ne.s32.totalorder %s223, %s224
      %p238 = scmp.eq.s32.totalorder %s36, 1
      %p239 = por %p237, %p238
      %p241 = scmp.ne.s32.totalorder %s224, %s240
      %p242 = scmp.eq.s32.totalorder %s36, 0
      %p243 = por %p241, %p242
      %p244 = scmp.le.s32.totalorder 1, %s30
      %p245 = scmp.lt.s32.totalorder %s30, 3
      %p246 = pnand %p244, %p245
      %p247 = pneg %p246
      // Predicated region
      $region9: #{tpu_custom_call.1} parent=5 // pred_check
        _
      $region10: #{tpu_custom_call.1} parent=5 // pred_check_branch
        %249 = sbr.rel (%p246) target = $region12
      $region11: #{tpu_custom_call.1} parent=5 // pred_region
        %s250 = ssub.s32 %s30, 1
        // Predicated region
        $region13: #{tpu_custom_call.1} parent=11 // pred_check
          %p251 = pneg %p124
        $region14: #{tpu_custom_call.1} parent=11 // pred_check_branch
          %253 = sbr.rel (%p251) target = $region16
        $region15: #{tpu_custom_call.1} parent=11 // pred_region
          %s255 = ssub.s32 128, 128
          %256 = vsyncadd [#allocation10], %s255
          %s257 = smul.addr %s40, 128
          %s258 = scalar_lea.hbm %s4, %s257
          %s260 = sshll.u32 [#allocation9], 4
          %s261 = int_to_ptr.vmem [resolvable:$true] %s260
          %263 = dma.hbm_to_vmem [thread:$0]  %s258, 128, %s261, [#allocation10]
        $region16: #{tpu_custom_call.1} parent=11 // pred_fallthru
          _
        // Predicated region
        $region17: #{tpu_custom_call.1} parent=11 // pred_check
          %p264 = pneg %p145
        $region18: #{tpu_custom_call.1} parent=11 // pred_check_branch
          %266 = sbr.rel (%p264) target = $region20
        $region19: #{tpu_custom_call.1} parent=11 // pred_region
          %s268 = ssub.s32 256, 256
          %269 = vsyncadd [#allocation10], %s268
          %s270 = sshll.u32 [#allocation11], 4
          %s271 = int_to_ptr.vmem [resolvable:$true] %s270
          %276 = dma.hbm_to_vmem [thread:$0]  %s5, 256, %s271, [#allocation10], 128, 128, 8
        $region20: #{tpu_custom_call.1} parent=11 // pred_fallthru
          _
        // Predicated region
        $region21: #{tpu_custom_call.1} parent=11 // pred_check
          %p277 = pneg %p166
        $region22: #{tpu_custom_call.1} parent=11 // pred_check_branch
          %279 = sbr.rel (%p277) target = $region24
        $region23: #{tpu_custom_call.1} parent=11 // pred_region
          %s281 = ssub.s32 512, 512
          %282 = vsyncadd [#allocation13], %s281
          %s283 = sshll.u32 [#allocation12], 4
          %s284 = int_to_ptr.vmem [resolvable:$true] %s283
          %289 = dma.hbm_to_vmem [thread:$0]  %s6, 512, %s284, [#allocation13], 128, 128, 8
        $region24: #{tpu_custom_call.1} parent=11 // pred_fallthru
          _
        // Predicated region
        $region25: #{tpu_custom_call.1} parent=11 // pred_check
          %p290 = pneg %p187
        $region26: #{tpu_custom_call.1} parent=11 // pred_check_branch
          %292 = sbr.rel (%p290) target = $region28
        $region27: #{tpu_custom_call.1} parent=11 // pred_region
          %s294 = ssub.s32 41728, 41728
          %295 = vsyncadd [#allocation13], %s294
          %s296 = sshll.u32 [#allocation14], 4
          %s297 = int_to_ptr.vmem [resolvable:$true] %s296
          %302 = dma.hbm_to_vmem [thread:$0]  %s7, 41728, %s297, [#allocation13], 128, 128, 8
        $region28: #{tpu_custom_call.1} parent=11 // pred_fallthru
          _
        // Predicated region
        $region29: #{tpu_custom_call.1} parent=11 // pred_check
          %p303 = pneg %p208
        $region30: #{tpu_custom_call.1} parent=11 // pred_check_branch
          %305 = sbr.rel (%p303) target = $region32
        $region31: #{tpu_custom_call.1} parent=11 // pred_region
          %s307 = ssub.s32 603136, 603136
          %308 = vsyncadd [#allocation16], %s307
          %s309 = sshll.u32 [#allocation15], 4
          %s310 = int_to_ptr.vmem [resolvable:$true] %s309
          %315 = dma.hbm_to_vmem [thread:$0]  %s8, 603136, %s310, [#allocation16], 128, 128, 8
        $region32: #{tpu_custom_call.1} parent=11 // pred_fallthru
          _
      $region12: #{tpu_custom_call.1} parent=5 // pred_fallthru
        _
      %p316 = scmp.lt.s32.totalorder %s30, 2
      // Predicated region
      $region33: #{tpu_custom_call.1} parent=5 // pred_check
        %p317 = pneg %p316
      $region34: #{tpu_custom_call.1} parent=5 // pred_check_branch
        %319 = sbr.rel (%p317) target = $region36
      $region35: #{tpu_custom_call.1} parent=5 // pred_region
        // Predicated region
        $region37: #{tpu_custom_call.1} parent=35 // pred_check
          %p320 = pneg %p64
        $region38: #{tpu_custom_call.1} parent=35 // pred_check_branch
          %322 = sbr.rel (%p320) target = $region40
        $region39: #{tpu_custom_call.1} parent=35 // pred_region
          %s323 = sand.u32 %s54, 1
          %s324 = scalar_lea.sflag [#allocation7], %s323
          %s325 = sand.u32 %s54, 1
          %s326 = smul.addr %s325, 8
          %s327 = scalar_lea.vmem [#allocation6], %s326
          %s329 = ssub.s32 128, 128
          %330 = vsyncadd %s324, %s329
          %s331 = sadd.s32 %s38, %s37
          %s332 = smul.addr %s331, 128
          %s333 = scalar_lea.hbm %s2, %s332
          %s335 = sshll.u32 %s327, 4
          %s336 = int_to_ptr.vmem [resolvable:$true] %s335
          %338 = dma.hbm_to_vmem [thread:$0]  %s333, 128, %s336, %s324
        $region40: #{tpu_custom_call.1} parent=35 // pred_fallthru
          _
        // Predicated region
        $region41: #{tpu_custom_call.1} parent=35 // pred_check
          %p339 = pneg %p92
        $region42: #{tpu_custom_call.1} parent=35 // pred_check_branch
          %341 = sbr.rel (%p339) target = $region44
        $region43: #{tpu_custom_call.1} parent=35 // pred_region
          %p342 = scmp.lt.s32.totalorder %s37, 1
          %s343 = scalar_select %p342, %s37, 1
          %p344 = scmp.lt.s32.totalorder %s38, 0
          %s345 = scalar_select %p344, %s38, 0
          %s346 = sadd.s32 %s345, %s343
          %s347 = smul.addr %s346, 8
          %s348 = scalar_lea.vmem %s3, %s347
        $region44: #{tpu_custom_call.1} parent=35 // pred_fallthru
          _
      $region36: #{tpu_custom_call.1} parent=5 // pred_fallthru
        _
      %p349 = scmp.le.s32.totalorder 1, %s30
      %p350 = scmp.lt.s32.totalorder %s30, 3
      %p351 = pnand %p349, %p350
      %p352 = pneg %p351
      // Predicated region
      $region45: #{tpu_custom_call.1} parent=5 // pred_check
        _
      $region46: #{tpu_custom_call.1} parent=5 // pred_check_branch
        %354 = sbr.rel (%p351) target = $region48
      $region47: #{tpu_custom_call.1} parent=5 // pred_region
        %s355 = ssub.s32 %s30, 1
        %s356 = sand.u32 %s57, 1
        %s357 = scalar_lea.sflag [#allocation7], %s356
        %s358 = sand.u32 %s57, 1
        %s359 = smul.addr %s358, 8
        %s360 = scalar_lea.vmem [#allocation6], %s359
        // Predicated region
        $region49: #{tpu_custom_call.1} parent=47 // pred_check
          %p361 = pneg %p70
        $region50: #{tpu_custom_call.1} parent=47 // pred_check_branch
          %363 = sbr.rel (%p361) target = $region52
        $region51: #{tpu_custom_call.1} parent=47 // pred_region
          %364 = dma.done %s357, 128
        $region52: #{tpu_custom_call.1} parent=47 // pred_fallthru
          _
        // Predicated region
        $region53: #{tpu_custom_call.1} parent=47 // pred_check
          %p365 = pneg %p124
        $region54: #{tpu_custom_call.1} parent=47 // pred_check_branch
          %367 = sbr.rel (%p365) target = $region56
        $region55: #{tpu_custom_call.1} parent=47 // pred_region
          %368 = dma.done [#allocation10], 128
        $region56: #{tpu_custom_call.1} parent=47 // pred_fallthru
          _
        // Predicated region
        $region57: #{tpu_custom_call.1} parent=47 // pred_check
          %p369 = pneg %p145
        $region58: #{tpu_custom_call.1} parent=47 // pred_check_branch
          %371 = sbr.rel (%p369) target = $region60
        $region59: #{tpu_custom_call.1} parent=47 // pred_region
          %372 = dma.done [#allocation10], 256
        $region60: #{tpu_custom_call.1} parent=47 // pred_fallthru
          _
        // Predicated region
        $region61: #{tpu_custom_call.1} parent=47 // pred_check
          %p373 = pneg %p166
        $region62: #{tpu_custom_call.1} parent=47 // pred_check_branch
          %375 = sbr.rel (%p373) target = $region64
        $region63: #{tpu_custom_call.1} parent=47 // pred_region
          %376 = dma.done [#allocation13], 512
        $region64: #{tpu_custom_call.1} parent=47 // pred_fallthru
          _
        // Predicated region
        $region65: #{tpu_custom_call.1} parent=47 // pred_check
          %p377 = pneg %p187
        $region66: #{tpu_custom_call.1} parent=47 // pred_check_branch
          %379 = sbr.rel (%p377) target = $region68
        $region67: #{tpu_custom_call.1} parent=47 // pred_region
          %380 = dma.done [#allocation13], 41728
        $region68: #{tpu_custom_call.1} parent=47 // pred_fallthru
          _
        // Predicated region
        $region69: #{tpu_custom_call.1} parent=47 // pred_check
          %p381 = pneg %p208
        $region70: #{tpu_custom_call.1} parent=47 // pred_check_branch
          %383 = sbr.rel (%p381) target = $region72
        $region71: #{tpu_custom_call.1} parent=47 // pred_region
          %384 = dma.done [#allocation16], 603136
        $region72: #{tpu_custom_call.1} parent=47 // pred_fallthru
          _
        %s385 = sand.u32 %s57, 1
        %s386 = scalar_lea.sflag [#allocation7], %s385
        %s387 = sand.u32 %s57, 1
        %s388 = smul.addr %s387, 8
        %s389 = scalar_lea.vmem [#allocation6], %s388
        %p390 = pneg %p70
        %p391 = pneg %p67
        %p392 = scmp.lt.s32.totalorder %s39, 1
        %s393 = scalar_select %p392, %s39, 1
        %p394 = scmp.lt.s32.totalorder %s40, 0
        %s395 = scalar_select %p394, %s40, 0
        %s396 = sadd.s32 %s395, %s393
        %s397 = smul.addr %s396, 8
        %s398 = scalar_lea.vmem %s3, %s397
        %p399 = pneg %p98
        %p400 = pneg %p95
        %p401 = pneg %p124
        %p402 = pneg %p121
        %p403 = pneg %p145
        %p404 = pneg %p142
        %p405 = pneg %p166
        %p406 = pneg %p163
        %p407 = pneg %p187
        %p408 = pneg %p184
        %p409 = pneg %p208
        %p410 = pneg %p205
        %p411 = pneg %p236
        %p412 = pneg %p233
        %s413 = sand.u32 %s223, 1
        %s414 = scalar_lea.sflag [#allocation8], %s413
        %s415 = sand.u32 %s223, 1
        %s416 = smul.addr %s415, 8
        %s417 = scalar_lea.vmem [#allocation17], %s416
        %p418 = scmp.lt.s32.totalorder %s39, 1
        %s419 = scalar_select %p418, %s39, 1
        %p420 = scmp.lt.s32.totalorder %s40, 0
        %s421 = scalar_select %p420, %s40, 0
        %s422 = sadd.s32 %s421, %s419
        %s423 = smul.addr %s422, 8
        %s424 = scalar_lea.vmem %s3, %s423
        %s425 = sadd.s32 %s39, %s40
        %s426 = smul.u32 %s425, 8
        %v427 = vld [vmem:[%s360] sm:$0xff]
        %v428 = vld [vmem:[#allocation11] sm:$0xff]
        %v429 = vld [vmem:[#allocation11 + $0x8] sm:$0x3f]
        %v430 = vld [vmem:[%s424] sm:$0xff]
        %v431 = vadd.s32 %v430, 2
        %v432 = vlaneseq
        %v433 = vand.u32 %v432, 127
        %434 = vset.pattern.permute.xlu0 0
        %435 = vperm.xlu0 %434, %v430
        %v436 = vpop.permute.xlu0 %435
        %vm437 = vcmp.eq.s32.totalorder %v433, %v436
        %438 = vset.pattern.permute.xlu0 1
        %439 = vperm.xlu0 %438, %v431
        %v440 = vpop.permute.xlu0 %439
        %vm441 = vcmp.eq.s32.totalorder %v433, %v440
        %vm442 = vmor %vm437, %vm441
        %v443 = vsel %vm442, 1, 0
        %v444 = vcvt.s32.f32 %v443
        %v445 = vld [vmem:[#allocation12] sm:$0xff]
        %v446 = vld [vmem:[#allocation12 + $0x8] sm:$0xff]
        %v447 = vld [vmem:[#allocation12 + $0x10] sm:$0xff]
        %v448 = vld [vmem:[#allocation12 + $0x18] sm:$0xff]
        %vm449 = vcmask 261120
        %v451 = vsel %vm449, %v444, 0
        %453 = vmatprep.subr.mxu0 0.0
        %454 = vmatpush1.msra.mxu0 0.0
        %455 = vmatprep.subr.mxu0 0.0
        %456 = vmatpush1.msra.mxu0 0.0
        %457 = vmatprep.subr.mxu0 0.0
        %458 = vmatpush1.msra.mxu0 0.0
        %459 = vmatprep.subr.mxu0 0.0
        %460 = vmatpush1.msra.mxu0 0.0
        %461 = vmatprep.subr.mxu0 0.0
        %462 = vmatpush1.msra.mxu0 0.0
        %463 = vmatprep.subr.mxu0 0.0
        %464 = vmatpush1.msra.mxu0 0.0
        %465 = vmatprep.subr.mxu0 0.0
        %466 = vmatpush1.msra.mxu0 0.0
        %467 = vmatprep.subr.mxu0 0.0
        %468 = vmatpush1.msra.mxu0 0.0
        %469 = vmatprep.subr.mxu0 0.0
        %470 = vmatpush1.msra.mxu0 0.0
        %471 = vmatprep.subr.mxu0 0.0
        %472 = vmatpush1.msra.mxu0 0.0
        %473 = vmatprep.subr.mxu0 0.0
        %474 = vmatpush1.msra.mxu0 0.0
        %475 = vmatprep.subr.mxu0 0.0
        %476 = vmatpush1.msra.mxu0 0.0
        %477 = vmatprep.subr.mxu0 0.0
        %478 = vmatpush1.msra.mxu0 %v448
        %479 = vmatprep.subr.mxu0 0.0
        %480 = vmatpush1.msra.mxu0 %v447
        %481 = vmatprep.subr.mxu0 0.0
        %482 = vmatpush1.msra.mxu0 %v446
        %483 = vmatprep.subr.mxu0 0.0
        %484 = vmatpush1.msra.mxu0 %v445
        %485 = vmatprep.subr.mxu0 0.0
        %486 = vmatpush2.msra.mxu0 0.0
        %487 = vmatprep.subr.mxu0 0.0
        %488 = vmatpush2.msra.mxu0 0.0
        %489 = vmatprep.subr.mxu0 0.0
        %490 = vmatpush2.msra.mxu0 0.0
        %491 = vmatprep.subr.mxu0 0.0
        %492 = vmatpush2.msra.mxu0 0.0
        %493 = vmatprep.subr.mxu0 0.0
        %494 = vmatpush2.msra.mxu0 0.0
        %495 = vmatprep.subr.mxu0 0.0
        %496 = vmatpush2.msra.mxu0 0.0
        %497 = vmatprep.subr.mxu0 0.0
        %498 = vmatpush2.msra.mxu0 0.0
        %499 = vmatprep.subr.mxu0 0.0
        %500 = vmatpush2.msra.mxu0 0.0
        %501 = vmatprep.subr.mxu0 0.0
        %502 = vmatpush2.msra.mxu0 0.0
        %503 = vmatprep.subr.mxu0 0.0
        %504 = vmatpush2.msra.mxu0 0.0
        %505 = vmatprep.subr.mxu0 0.0
        %506 = vmatpush2.msra.mxu0 0.0
        %507 = vmatprep.subr.mxu0 0.0
        %508 = vmatpush2.msra.mxu0 0.0
        %509 = vmatprep.subr.mxu0 0.0
        %510 = vmatpush2.msra.mxu0 0.0
        %511 = vmatprep.subr.mxu0 0.0
        %512 = vmatpush2.msra.mxu0 0.0
        %513 = vmatprep.subr.mxu0 0.0
        %514 = vmatpush2.msra.mxu0 0.0
        %515 = vmatprep.subr.mxu0 0.0
        %516 = vmatpush2.msra.mxu0 0.0
        %517 = vmatprep.mubr.f32.mxu0 0.0
        %518 = vmatmul.mubr.f32.gmra.mxu0 %v451
        %v519 = vpop.f32.mrf.mxu0
        %v520 = vadd.f32 0.0, %v519
        %v521 = vpop.f32.mrf.mxu0
        %522 = vdwg.mxu0
        %s523 = sld [smem:[#allocation4 + %s426]]
        %s524 = scalar_lea.vmem [#allocation14], %s523
        %v525 = vld [vmem:[%s524] sm:$0x1]
        %s526 = sld [smem:[#allocation5 + %s426]]
        %s527 = scalar_lea.vmem [#allocation15], %s526
        %v528 = vld [vmem:[%s527] sm:$0x1]
        %v529 = vadd.f32 %v525, %v528
        %530 = vst [vmem:[#allocation2] sm:$0x1] %v529
        %s531 = sadd.s32 %s426, 1
        %s532 = sld [smem:[#allocation4 + %s531]]
        %s533 = scalar_lea.vmem [#allocation14], %s532
        %v534 = vld [vmem:[%s533] sm:$0x1]
        %s535 = sld [smem:[#allocation5 + %s531]]
        %s536 = scalar_lea.vmem [#allocation15], %s535
        %v537 = vld [vmem:[%s536] sm:$0x1]
        %v538 = vadd.f32 %v534, %v537
        %539 = vst [vmem:[#allocation2 + $0x1] sm:$0x1] %v538
        %s540 = sadd.s32 %s426, 2
        %s541 = sld [smem:[#allocation4 + %s540]]
        %s542 = scalar_lea.vmem [#allocation14], %s541
        %v543 = vld [vmem:[%s542] sm:$0x1]
        %s544 = sld [smem:[#allocation5 + %s540]]
        %s545 = scalar_lea.vmem [#allocation15], %s544
        %v546 = vld [vmem:[%s545] sm:$0x1]
        %v547 = vadd.f32 %v543, %v546
        %548 = vst [vmem:[#allocation2 + $0x2] sm:$0x1] %v547
        %s549 = sadd.s32 %s426, 3
        %s550 = sld [smem:[#allocation4 + %s549]]
        %s551 = scalar_lea.vmem [#allocation14], %s550
        %v552 = vld [vmem:[%s551] sm:$0x1]
        %s553 = sld [smem:[#allocation5 + %s549]]
        %s554 = scalar_lea.vmem [#allocation15], %s553
        %v555 = vld [vmem:[%s554] sm:$0x1]
        %v556 = vadd.f32 %v552, %v555
        %557 = vst [vmem:[#allocation2 + $0x3] sm:$0x1] %v556
        %s558 = sadd.s32 %s426, 4
        %s559 = sld [smem:[#allocation4 + %s558]]
        %s560 = scalar_lea.vmem [#allocation14], %s559
        %v561 = vld [vmem:[%s560] sm:$0x1]
        %s562 = sld [smem:[#allocation5 + %s558]]
        %s563 = scalar_lea.vmem [#allocation15], %s562
        %v564 = vld [vmem:[%s563] sm:$0x1]
        %v565 = vadd.f32 %v561, %v564
        %566 = vst [vmem:[#allocation2 + $0x4] sm:$0x1] %v565
        %s567 = sadd.s32 %s426, 5
        %s568 = sld [smem:[#allocation4 + %s567]]
        %s569 = scalar_lea.vmem [#allocation14], %s568
        %v570 = vld [vmem:[%s569] sm:$0x1]
        %s571 = sld [smem:[#allocation5 + %s567]]
        %s572 = scalar_lea.vmem [#allocation15], %s571
        %v573 = vld [vmem:[%s572] sm:$0x1]
        %v574 = vadd.f32 %v570, %v573
        %575 = vst [vmem:[#allocation2 + $0x5] sm:$0x1] %v574
        %s576 = sadd.s32 %s426, 6
        %s577 = sld [smem:[#allocation4 + %s576]]
        %s578 = scalar_lea.vmem [#allocation14], %s577
        %v579 = vld [vmem:[%s578] sm:$0x1]
        %s580 = sld [smem:[#allocation5 + %s576]]
        %s581 = scalar_lea.vmem [#allocation15], %s580
        %v582 = vld [vmem:[%s581] sm:$0x1]
        %v583 = vadd.f32 %v579, %v582
        %584 = vst [vmem:[#allocation2 + $0x6] sm:$0x1] %v583
        %s585 = sadd.s32 %s426, 7
        %s586 = sld [smem:[#allocation4 + %s585]]
        %s587 = scalar_lea.vmem [#allocation14], %s586
        %v588 = vld [vmem:[%s587] sm:$0x1]
        %s589 = sld [smem:[#allocation5 + %s585]]
        %s590 = scalar_lea.vmem [#allocation15], %s589
        %v591 = vld [vmem:[%s590] sm:$0x1]
        %v592 = vadd.f32 %v588, %v591
        %593 = vst [vmem:[#allocation2 + $0x7] sm:$0x1] %v592
        %v594 = vld [vmem:[#allocation9] sm:$0xff]
        %vm595 = vcmask 113664
        %v597 = vsel %vm595, %v427, 0
        %vm599 = vcmask 1045504
        %v601 = vsel %vm599, %v429, 0
        %603 = vmatprep.subr.mxu0 0.0
        %604 = vmatpush1.msra.mxu0 0.0
        %605 = vmatprep.subr.mxu0 0.0
        %606 = vmatpush1.msra.mxu0 0.0
        %607 = vmatprep.subr.mxu0 0.0
        %608 = vmatpush1.msra.mxu0 0.0
        %609 = vmatprep.subr.mxu0 0.0
        %610 = vmatpush1.msra.mxu0 0.0
        %611 = vmatprep.subr.mxu0 0.0
        %612 = vmatpush1.msra.mxu0 0.0
        %613 = vmatprep.subr.mxu0 0.0
        %614 = vmatpush1.msra.mxu0 0.0
        %615 = vmatprep.subr.mxu0 0.0
        %616 = vmatpush1.msra.mxu0 0.0
        %617 = vmatprep.subr.mxu0 0.0
        %618 = vmatpush1.msra.mxu0 0.0
        %619 = vmatprep.subr.mxu0 0.0
        %620 = vmatpush1.msra.mxu0 0.0
        %621 = vmatprep.subr.mxu0 0.0
        %622 = vmatpush1.msra.mxu0 0.0
        %623 = vmatprep.subr.mxu0 0.0
        %624 = vmatpush1.msra.mxu0 0.0
        %625 = vmatprep.subr.mxu0 0.0
        %626 = vmatpush1.msra.mxu0 0.0
        %627 = vmatprep.subr.mxu0 0.0
        %628 = vmatpush1.msra.mxu0 0.0
        %629 = vmatprep.subr.mxu0 0.0
        %630 = vmatpush1.msra.mxu0 0.0
        %631 = vmatprep.subr.mxu0 0.0
        %632 = vmatpush1.msra.mxu0 %v601
        %633 = vmatprep.subr.mxu0 0.0
        %634 = vmatpush1.msra.mxu0 %v428
        %635 = vmatprep.subr.mxu0 0.0
        %636 = vmatpush2.msra.mxu0 0.0
        %637 = vmatprep.subr.mxu0 0.0
        %638 = vmatpush2.msra.mxu0 0.0
        %639 = vmatprep.subr.mxu0 0.0
        %640 = vmatpush2.msra.mxu0 0.0
        %641 = vmatprep.subr.mxu0 0.0
        %642 = vmatpush2.msra.mxu0 0.0
        %643 = vmatprep.subr.mxu0 0.0
        %644 = vmatpush2.msra.mxu0 0.0
        %645 = vmatprep.subr.mxu0 0.0
        %646 = vmatpush2.msra.mxu0 0.0
        %647 = vmatprep.subr.mxu0 0.0
        %648 = vmatpush2.msra.mxu0 0.0
        %649 = vmatprep.subr.mxu0 0.0
        %650 = vmatpush2.msra.mxu0 0.0
        %651 = vmatprep.subr.mxu0 0.0
        %652 = vmatpush2.msra.mxu0 0.0
        %653 = vmatprep.subr.mxu0 0.0
        %654 = vmatpush2.msra.mxu0 0.0
        %655 = vmatprep.subr.mxu0 0.0
        %656 = vmatpush2.msra.mxu0 0.0
        %657 = vmatprep.subr.mxu0 0.0
        %658 = vmatpush2.msra.mxu0 0.0
        %659 = vmatprep.subr.mxu0 0.0
        %660 = vmatpush2.msra.mxu0 0.0
        %661 = vmatprep.subr.mxu0 0.0
        %662 = vmatpush2.msra.mxu0 0.0
        %663 = vmatprep.subr.mxu0 0.0
        %664 = vmatpush2.msra.mxu0 0.0
        %665 = vmatprep.subr.mxu0 0.0
        %666 = vmatpush2.msra.mxu0 0.0
        %667 = vmatprep.mubr.f32.mxu0 0.0
        %668 = vmatmul.mubr.f32.gmra.mxu0 %v597
        %v669 = vpop.f32.mrf.mxu0
        %v670 = vadd.f32 %v594, %v669
        %v671 = vpop.f32.mrf.mxu0
        %672 = vdwg.mxu0
        %v673 = vadd.f32 %v670, %v520
        %v674 = vld [vmem:[#allocation2] sm:$0xff]
        %v675 = vadd.f32 %v673, %v674
        %676 = vst [vmem:[%s417] sm:$0xff] %v675
        %s677 = sand.u32 %s223, 1
        %s678 = scalar_lea.sflag [#allocation8], %s677
        %s679 = sand.u32 %s223, 1
        %s680 = smul.addr %s679, 8
        %s681 = scalar_lea.vmem [#allocation17], %s680
        // Predicated region
        $region73: #{tpu_custom_call.1} parent=47 // pred_check
          %p682 = pneg %p233
        $region74: #{tpu_custom_call.1} parent=47 // pred_check_branch
          %684 = sbr.rel (%p682) target = $region76
        $region75: #{tpu_custom_call.1} parent=47 // pred_region
          %s686 = ssub.s32 128, 128
          %687 = vsyncadd %s678, %s686
          %s688 = sadd.s32 %s40, %s39
          %s689 = smul.addr %s688, 128
          %s690 = scalar_lea.hbm %s9, %s689
          %s692 = sshll.u32 %s681, 4
          %s693 = int_to_ptr.vmem [resolvable:$true] %s692
          %695 = dma.vmem_to_hbm [thread:$0]  %s693, 128, %s690, %s678
        $region76: #{tpu_custom_call.1} parent=47 // pred_fallthru
          _
      $region48: #{tpu_custom_call.1} parent=5 // pred_fallthru
        _
      %p696 = scmp.le.s32.totalorder 2, %s30
      // Predicated region
      $region77: #{tpu_custom_call.1} parent=5 // pred_check
        %p697 = pneg %p696
      $region78: #{tpu_custom_call.1} parent=5 // pred_check_branch
        %699 = sbr.rel (%p697) target = $region80
      $region79: #{tpu_custom_call.1} parent=5 // pred_region
        %s700 = ssub.s32 %s30, 2
        // Predicated region
        $region81: #{tpu_custom_call.1} parent=79 // pred_check
          %p701 = pneg %p239
        $region82: #{tpu_custom_call.1} parent=79 // pred_check_branch
          %703 = sbr.rel (%p701) target = $region84
        $region83: #{tpu_custom_call.1} parent=79 // pred_region
          %s704 = sand.u32 %s224, 1
          %s705 = scalar_lea.sflag [#allocation8], %s704
          %s706 = sand.u32 %s224, 1
          %s707 = smul.addr %s706, 8
          %s708 = scalar_lea.vmem [#allocation17], %s707
          %709 = dma.done %s705, 128
        $region84: #{tpu_custom_call.1} parent=79 // pred_fallthru
          _
      $region80: #{tpu_custom_call.1} parent=5 // pred_fallthru
        _
    $region6: #{tpu_custom_call.1} parent=1 // loop_footer
      %s34 = sadd.s32 1, %s30
    $region7: #{tpu_custom_call.1} parent=1 // loop_footer_branch
      %29 = sbr.rel target = $region3
    $region8: #{tpu_custom_call.1} parent=1 // loop_exit
      _
    %710 = vsyncpa [#allocation7], 1
    %s711 = scalar_lea.sflag [#allocation7], 1
    %712 = vsyncpa %s711, 1
    %713 = vsyncpa [#allocation10], 1
    %714 = vsyncpa [#allocation13], 1
    %715 = vsyncpa [#allocation16], 1
    %716 = vsyncpa [#allocation8], 1
    %s717 = scalar_lea.sflag [#allocation8], 1
    %718 = vsyncpa %s717, 1

</llo_original>
